<compile_context>
chip_gen: v7x
topology: tpu7x:2x2x1
jax: 0.10.0
libtpu: 0.0.40
codegen_flags: <defaults>
</compile_context>

<pallas_src>
import functools

import jax
import jax.numpy as jnp
from jax.experimental import pallas as pl
from jax.experimental.pallas import tpu as pltpu


def _d_constraint2_kernel(d_ref, out_ref, acc_ref, *, k, n_clusters, tail_rows):
    step = pl.program_id(0)
    last = pl.num_programs(0) - 1

    @pl.when(step == 0)
    def _():
        acc_ref[...] = jnp.zeros_like(acc_ref)

    def accumulate(d):
        # Contract over dim 0 on both operands: G += d^T d without an explicit
        # XLU transpose; accumulate in f32 regardless of input dtype.
        acc_ref[...] += jax.lax.dot_general(
            d, d,
            dimension_numbers=(((0,), (0,)), ((), ())),
            preferred_element_type=jnp.float32,
        )

    if tail_rows:
        # N is not a multiple of tn: the last tile contains rows past the end
        # of the array; zero them in-kernel instead of padding d in HBM.
        @pl.when(step != last)
        def _():
            accumulate(d_ref[...])

        @pl.when(step == last)
        def _():
            d = d_ref[...]
            row = jax.lax.broadcasted_iota(jnp.int32, d.shape, 0)
            accumulate(jnp.where(row < tail_rows, d, jnp.zeros_like(d)))
    else:
        accumulate(d_ref[...])

    @pl.when(step == last)
    def _():
        D = acc_ref.shape[1]
        col_acc = jnp.zeros((1, D), jnp.float32)  # per-column partial sums

        # Rows that intersect a zeroed k x k diagonal block: only n_clusters
        # strips of height k need masking, and the mask is a static column
        # window per cluster.  Masking directly (instead of total - diag)
        # avoids cancellation when G is nearly block-diagonal.
        col1 = jax.lax.broadcasted_iota(jnp.int32, (1, D), 1)
        for i in range(n_clusters):
            r0 = i * k
            if r0 >= D:
                break
            h = min(k, D - r0)
            keep = jnp.logical_not((col1 >= r0) & (col1 < r0 + h))
            for c0 in range(0, h, 128):  # bound temporaries for very large k
                ch = min(128, h - c0)
                g = acc_ref[pl.ds(r0 + c0, ch), :]
                g = jnp.where(keep, g, 0.0)
                col_acc = col_acc + jnp.sum(g * g, axis=0, keepdims=True)

        # Rows past the block-diagonal region: unmasked sum of squares in
        # 128-row strips (fori_loop bounds live ranges for the scheduler).
        R = min(n_clusters * k, D)
        rem = D - R
        rs = 128
        n_full = rem // rs
        tail = rem - n_full * rs
        if n_full:
            def body(s, carry):
                off = R + pl.multiple_of(s * rs, rs)
                g = acc_ref[pl.ds(off, rs), :]
                return carry + jnp.sum(g * g, axis=0, keepdims=True)

            col_acc = jax.lax.fori_loop(0, n_full, body, col_acc,
                                        unroll=n_full <= 4)
        if tail:
            g = acc_ref[pl.ds(R + n_full * rs, tail), :]
            col_acc = col_acc + jnp.sum(g * g, axis=0, keepdims=True)

        out_ref[0, 0] = jnp.sqrt(jnp.sum(col_acc))  # one cross-lane reduce


def _vmem_budget_bytes():
    """Generation-aware VMEM budget with headroom for Mosaic scratch."""
    cap = 64 << 20
    try:
        cap = int(pltpu.get_tpu_info().vmem_capacity_bytes)
    except Exception:
        pass
    # ~56 MiB on v7x (64 MiB physical), ~112 MiB on v5e/v6e (128 MiB).
    return max(16 << 20, min(cap - (8 << 20), (cap * 7) // 8))


def _xla_d_constraint2(d, k, n_clusters):
    """Fallback for tiny D (< one lane tile: overhead/padding dominated) or
    D too large for a resident (D, D) f32 VMEM accumulator."""
    D = d.shape[1]
    g = jnp.dot(d.T, d, preferred_element_type=jnp.float32)
    blk_r = jnp.arange(D)[:, None] // k
    blk_c = jnp.arange(D)[None, :] // k
    off_block = jnp.logical_not((blk_r == blk_c) & (blk_r < n_clusters))
    g = jnp.where(off_block, g, 0.0)
    return jnp.sqrt(jnp.sum(g * g))


def d_constraint2(d, k, n_clusters):
    """Pallas implementation of D_constraint2.forward(d, k, n_clusters)."""
    d = jnp.asarray(d)
    if d.dtype not in (jnp.dtype(jnp.float32), jnp.dtype(jnp.bfloat16)):
        d = d.astype(jnp.float32)
    N, D = d.shape
    k = int(k)
    n_clusters = int(n_clusters)
    itemsize = d.dtype.itemsize

    budget = _vmem_budget_bytes()
    acc_bytes = D * D * 4
    slack = 4 << 20  # epilogue temporaries + internal compiler scratch
    avail = budget - acc_bytes - slack

    if D < 128 or avail < 2 * 8 * D * itemsize:
        return _xla_d_constraint2(d, k, n_clusters)

    # Budget-aware row tile on the reduction axis: larger tn amortizes the
    # per-step (D, D) accumulator read-modify-write and ~0.35us step overhead.
    n_aligned = -(-N // 8) * 8
    tn_cap = min(2048, avail // (2 * D * itemsize), n_aligned)
    if tn_cap >= 512:
        tn = (tn_cap // 512) * 512
    elif tn_cap >= 128:
        tn = (tn_cap // 128) * 128
    else:
        tn = max(8, (tn_cap // 8) * 8)

    grid_steps = -(-N // tn)
    tail_rows = N - (grid_steps - 1) * tn
    if tail_rows == tn:
        tail_rows = 0  # evenly divisible: no in-kernel tail masking needed

    kernel = functools.partial(_d_constraint2_kernel, k=k,
                               n_clusters=n_clusters, tail_rows=tail_rows)

    need = acc_bytes + 2 * tn * D * itemsize + slack + (2 << 20)
    vmem_limit = int(min(budget, max(need, 16 << 20)))

    out = pl.pallas_call(
        kernel,
        out_shape=jax.ShapeDtypeStruct((1, 1), jnp.float32),
        grid_spec=pltpu.PrefetchScalarGridSpec(
            num_scalar_prefetch=0,
            grid=(grid_steps,),
            in_specs=[pl.BlockSpec((tn, D), lambda i: (i, 0))],
            out_specs=pl.BlockSpec(memory_space=pltpu.SMEM),
            scratch_shapes=[pltpu.VMEM((D, D), jnp.float32)],
        ),
        compiler_params=pltpu.CompilerParams(
            dimension_semantics=("arbitrary",),
            vmem_limit_bytes=vmem_limit,
        ),
        cost_estimate=pl.CostEstimate(
            flops=2 * grid_steps * tn * D * D,
            bytes_accessed=N * D * itemsize + 4,
            transcendentals=1,
        ),
    )(d)
    return out[0, 0]


def _reference(d, k, n_clusters):
    D = d.shape[1]
    S = jnp.ones((D, D), dtype=jnp.float32)
    for i in range(n_clusters):
        S = S.at[i * k:(i + 1) * k, i * k:(i + 1) * k].set(0.0)
    df = d.astype(jnp.float32)
    g = jnp.dot(df.T, df, precision=jax.lax.Precision.HIGHEST)
    return jnp.linalg.norm(g * S)


if __name__ == "__main__":
    key = jax.random.PRNGKey(0)
    k0, k1, k2 = jax.random.split(key, 3)

    # Case 1: single grid step; block-diagonal region covers half of D, so the
    # unmasked ragged-tail epilogue path is exercised (D=128, k=16, nc=4).
    N, D, kk, nc = 64, 128, 16, 4
    d = jax.random.normal(k0, (N, D), dtype=jnp.float32)
    out = jax.block_until_ready(d_constraint2(d, kk, nc))
    ref = jax.block_until_ready(_reference(d, kk, nc))
    assert jnp.allclose(out, ref, rtol=2e-3, atol=1e-2), (out, ref)

    # Case 2: multi-step grid with a ragged last tile (in-kernel tail masking,
    # no HBM pad copy) plus the full-strip fori_loop epilogue path.
    N2, D2, kk2, nc2 = 600, 256, 16, 8
    d2 = jax.random.normal(k1, (N2, D2), dtype=jnp.float32)
    out2 = jax.block_until_ready(d_constraint2(d2, kk2, nc2))
    ref2 = jax.block_until_ready(_reference(d2, kk2, nc2))
    assert jnp.allclose(out2, ref2, rtol=2e-3, atol=1e-2), (out2, ref2)

    # Case 3: tiny D -> overhead-dominated, dispatched to the plain XLA path.
    N3, D3, kk3, nc3 = 16, 32, 8, 3
    d3 = jax.random.normal(k2, (N3, D3), dtype=jnp.float32)
    out3 = jax.block_until_ready(d_constraint2(d3, kk3, nc3))
    ref3 = jax.block_until_ready(_reference(d3, kk3, nc3))
    assert jnp.allclose(out3, ref3, rtol=2e-3, atol=1e-2), (out3, ref3)

    print("KERNEL_OK")
</pallas_src>

<mosaic_0001>
module attributes {stable_mosaic.version = 11 : i64} {
  func.func @_d_constraint2_kernel(%arg0: i32, %arg1: memref<64x128xf32, #tpu.memory_space<vmem>>, %arg2: memref<1x1xf32, #tpu.memory_space<smem>>, %arg3: memref<128x128xf32, #tpu.memory_space<vmem>>) attributes {dimension_semantics = [#tpu.dimension_semantics<arbitrary>], iteration_bounds = array<i64: 1>, scalar_prefetch = 0 : i64, scratch_operands = 1 : i64, tpu.core_type = #tpu.core_type<tc>, window_params = [{transform_indices = @transform_0, window_bounds = array<i64: 64, 128>}, {transform_indices = @transform_1, window_bounds = array<i64: 1, 1>}]} {
    %c0_i32 = arith.constant 0 : i32
    %0 = arith.cmpi eq, %arg0, %c0_i32 : i32
    %1 = arith.extui %0 : i1 to i32
    %c0_i32_0 = arith.constant 0 : i32
    %2 = arith.cmpi ne, %1, %c0_i32_0 : i32
    scf.if %2 {
      %cst_8 = arith.constant 0.000000e+00 : f32
      %11 = vector.broadcast %cst_8 : f32 to vector<128x128xf32>
      %c0_9 = arith.constant 0 : index
      %c0_10 = arith.constant 0 : index
      %12 = vector.load %arg3[%c0_9, %c0_10] : memref<128x128xf32, #tpu.memory_space<vmem>>, vector<128x128xf32>
      tpu.vector_store %arg3[%c0_9, %c0_10], %11 {strides = array<i32>} : memref<128x128xf32, #tpu.memory_space<vmem>>, vector<128x128xf32>,
    } else {
    }
    %c0 = arith.constant 0 : index
    %c0_1 = arith.constant 0 : index
    %3 = vector.load %arg1[%c0, %c0_1] : memref<64x128xf32, #tpu.memory_space<vmem>>, vector<64x128xf32>
    %c0_2 = arith.constant 0 : index
    %c0_3 = arith.constant 0 : index
    %4 = vector.load %arg3[%c0_2, %c0_3] : memref<128x128xf32, #tpu.memory_space<vmem>>, vector<128x128xf32>
    %cst = arith.constant dense<0.000000e+00> : vector<128x128xf32>
    %5 = tpu.matmul %3, %3, %cst {dimension_numbers = #tpu.dot_dimension_numbers<[0], [0], [1], [1], [0, 1, 1, 1], [], []>} : vector<64x128xf32>, vector<64x128xf32>, vector<128x128xf32> -> vector<128x128xf32>
    %6 = arith.addf %4, %5 : vector<128x128xf32>
    %c0_4 = arith.constant 0 : index
    %c0_5 = arith.constant 0 : index
    %7 = vector.load %arg3[%c0_4, %c0_5] : memref<128x128xf32, #tpu.memory_space<vmem>>, vector<128x128xf32>
    tpu.vector_store %arg3[%c0_4, %c0_5], %6 {strides = array<i32>} : memref<128x128xf32, #tpu.memory_space<vmem>>, vector<128x128xf32>,
    %c0_i32_6 = arith.constant 0 : i32
    %8 = arith.cmpi eq, %arg0, %c0_i32_6 : i32
    %9 = arith.extui %8 : i1 to i32
    %c0_i32_7 = arith.constant 0 : i32
    %10 = arith.cmpi ne, %9, %c0_i32_7 : i32
    scf.if %10 {
      %cst_8 = arith.constant 0.000000e+00 : f32
      %11 = vector.broadcast %cst_8 : f32 to vector<1x128xf32>
      %12 = tpu.iota {dimensions = array<i32: 1>} : vector<1x128xi32>
      %c0_i32_9 = arith.constant 0 : i32
      %13 = vector.broadcast %c0_i32_9 : i32 to vector<1x128xi32>
      %14 = arith.cmpi sge, %12, %13 : vector<1x128xi32>
      %c16_i32 = arith.constant 16 : i32
      %15 = vector.broadcast %c16_i32 : i32 to vector<1x128xi32>
      %16 = arith.cmpi slt, %12, %15 : vector<1x128xi32>
      %17 = arith.andi %14, %16 : vector<1x128xi1>
      %cst_10 = arith.constant dense<true> : vector<1x128xi1>
      %18 = arith.xori %17, %cst_10 : vector<1x128xi1>
      %c0_11 = arith.constant 0 : index
      %c0_12 = arith.constant 0 : index
      %19 = vector.load %arg3[%c0_11, %c0_12] : memref<128x128xf32, #tpu.memory_space<vmem>>, vector<16x128xf32>
      %cst_13 = arith.constant 0.000000e+00 : f32
      %20 = vector.shape_cast %18 : vector<1x128xi1> to vector<1x128xi1>
      %21 = vector.broadcast %20 : vector<1x128xi1> to vector<16x128xi1>
      %22 = vector.broadcast %cst_13 : f32 to vector<16x128xf32>
      %23 = arith.select %21, %19, %22 : vector<16x128xi1>, vector<16x128xf32>
      %24 = arith.mulf %23, %23 : vector<16x128xf32>
      %cst_14 = arith.constant dense<0.000000e+00> : vector<128xf32>
      %25 = vector.multi_reduction <add>, %24, %cst_14 [0] : vector<16x128xf32> to vector<128xf32>
      %26 = vector.shape_cast %25 : vector<128xf32> to vector<1x128xf32>
      %27 = arith.addf %11, %26 : vector<1x128xf32>
      %c16_i32_15 = arith.constant 16 : i32
      %28 = vector.broadcast %c16_i32_15 : i32 to vector<1x128xi32>
      %29 = arith.cmpi sge, %12, %28 : vector<1x128xi32>
      %c32_i32 = arith.constant 32 : i32
      %30 = vector.broadcast %c32_i32 : i32 to vector<1x128xi32>
      %31 = arith.cmpi slt, %12, %30 : vector<1x128xi32>
      %32 = arith.andi %29, %31 : vector<1x128xi1>
      %cst_16 = arith.constant dense<true> : vector<1x128xi1>
      %33 = arith.xori %32, %cst_16 : vector<1x128xi1>
      %c16 = arith.constant 16 : index
      %c0_17 = arith.constant 0 : index
      %34 = vector.load %arg3[%c16, %c0_17] : memref<128x128xf32, #tpu.memory_space<vmem>>, vector<16x128xf32>
      %cst_18 = arith.constant 0.000000e+00 : f32
      %35 = vector.shape_cast %33 : vector<1x128xi1> to vector<1x128xi1>
      %36 = vector.broadcast %35 : vector<1x128xi1> to vector<16x128xi1>
      %37 = vector.broadcast %cst_18 : f32 to vector<16x128xf32>
      %38 = arith.select %36, %34, %37 : vector<16x128xi1>, vector<16x128xf32>
      %39 = arith.mulf %38, %38 : vector<16x128xf32>
      %cst_19 = arith.constant dense<0.000000e+00> : vector<128xf32>
      %40 = vector.multi_reduction <add>, %39, %cst_19 [0] : vector<16x128xf32> to vector<128xf32>
      %41 = vector.shape_cast %40 : vector<128xf32> to vector<1x128xf32>
      %42 = arith.addf %27, %41 : vector<1x128xf32>
      %c32_i32_20 = arith.constant 32 : i32
      %43 = vector.broadcast %c32_i32_20 : i32 to vector<1x128xi32>
      %44 = arith.cmpi sge, %12, %43 : vector<1x128xi32>
      %c48_i32 = arith.constant 48 : i32
      %45 = vector.broadcast %c48_i32 : i32 to vector<1x128xi32>
      %46 = arith.cmpi slt, %12, %45 : vector<1x128xi32>
      %47 = arith.andi %44, %46 : vector<1x128xi1>
      %cst_21 = arith.constant dense<true> : vector<1x128xi1>
      %48 = arith.xori %47, %cst_21 : vector<1x128xi1>
      %c32 = arith.constant 32 : index
      %c0_22 = arith.constant 0 : index
      %49 = vector.load %arg3[%c32, %c0_22] : memref<128x128xf32, #tpu.memory_space<vmem>>, vector<16x128xf32>
      %cst_23 = arith.constant 0.000000e+00 : f32
      %50 = vector.shape_cast %48 : vector<1x128xi1> to vector<1x128xi1>
      %51 = vector.broadcast %50 : vector<1x128xi1> to vector<16x128xi1>
      %52 = vector.broadcast %cst_23 : f32 to vector<16x128xf32>
      %53 = arith.select %51, %49, %52 : vector<16x128xi1>, vector<16x128xf32>
      %54 = arith.mulf %53, %53 : vector<16x128xf32>
      %cst_24 = arith.constant dense<0.000000e+00> : vector<128xf32>
      %55 = vector.multi_reduction <add>, %54, %cst_24 [0] : vector<16x128xf32> to vector<128xf32>
      %56 = vector.shape_cast %55 : vector<128xf32> to vector<1x128xf32>
      %57 = arith.addf %42, %56 : vector<1x128xf32>
      %c48_i32_25 = arith.constant 48 : i32
      %58 = vector.broadcast %c48_i32_25 : i32 to vector<1x128xi32>
      %59 = arith.cmpi sge, %12, %58 : vector<1x128xi32>
      %c64_i32 = arith.constant 64 : i32
      %60 = vector.broadcast %c64_i32 : i32 to vector<1x128xi32>
      %61 = arith.cmpi slt, %12, %60 : vector<1x128xi32>
      %62 = arith.andi %59, %61 : vector<1x128xi1>
      %cst_26 = arith.constant dense<true> : vector<1x128xi1>
      %63 = arith.xori %62, %cst_26 : vector<1x128xi1>
      %c48 = arith.constant 48 : index
      %c0_27 = arith.constant 0 : index
      %64 = vector.load %arg3[%c48, %c0_27] : memref<128x128xf32, #tpu.memory_space<vmem>>, vector<16x128xf32>
      %cst_28 = arith.constant 0.000000e+00 : f32
      %65 = vector.shape_cast %63 : vector<1x128xi1> to vector<1x128xi1>
      %66 = vector.broadcast %65 : vector<1x128xi1> to vector<16x128xi1>
      %67 = vector.broadcast %cst_28 : f32 to vector<16x128xf32>
      %68 = arith.select %66, %64, %67 : vector<16x128xi1>, vector<16x128xf32>
      %69 = arith.mulf %68, %68 : vector<16x128xf32>
      %cst_29 = arith.constant dense<0.000000e+00> : vector<128xf32>
      %70 = vector.multi_reduction <add>, %69, %cst_29 [0] : vector<16x128xf32> to vector<128xf32>
      %71 = vector.shape_cast %70 : vector<128xf32> to vector<1x128xf32>
      %72 = arith.addf %57, %71 : vector<1x128xf32>
      %c64 = arith.constant 64 : index
      %c0_30 = arith.constant 0 : index
      %73 = vector.load %arg3[%c64, %c0_30] : memref<128x128xf32, #tpu.memory_space<vmem>>, vector<64x128xf32>
      %74 = arith.mulf %73, %73 : vector<64x128xf32>
      %cst_31 = arith.constant dense<0.000000e+00> : vector<128xf32>
      %75 = vector.multi_reduction <add>, %74, %cst_31 [0] : vector<64x128xf32> to vector<128xf32>
      %76 = vector.shape_cast %75 : vector<128xf32> to vector<1x128xf32>
      %77 = arith.addf %72, %76 : vector<1x128xf32>
      %78 = vector.shape_cast %77 : vector<1x128xf32> to vector<1x1x128xf32>
      %cst_32 = arith.constant dense<0.000000e+00> : vector<1xf32>
      %79 = vector.multi_reduction <add>, %78, %cst_32 [1, 2] : vector<1x1x128xf32> to vector<1xf32>
      %80 = vector.shape_cast %79 : vector<1xf32> to vector<1x1x1xf32>
      %81 = vector.extract %80[0, 0, 0] : f32 from vector<1x1x1xf32>
      %82 = math.sqrt %81 : f32
      %c0_33 = arith.constant 0 : index
      %c0_34 = arith.constant 0 : index
      %83 = memref.load %arg2[%c0_33, %c0_34] : memref<1x1xf32, #tpu.memory_space<smem>>
      memref.store %82, %arg2[%c0_33, %c0_34] : memref<1x1xf32, #tpu.memory_space<smem>>
    } else {
    }
    return
  }
  func.func @transform_0(%arg0: i32) -> (i32, i32) {
    %c0_i32 = arith.constant 0 : i32
    %c0_i32_0 = arith.constant 0 : i32
    return %arg0, %c0_i32 : i32, i32
  }
  func.func @transform_1(%arg0: i32) -> (i32, i32) {
    %c0_i32 = arith.constant 0 : i32
    %c0_i32_0 = arith.constant 0 : i32
    %c0_i32_1 = arith.constant 0 : i32
    return %c0_i32, %c0_i32_0 : i32, i32
  }
}

</mosaic_0001>

<llo_original>
// kernel: tpu_custom_call.1
$region0: #{tpu_custom_call.1}
  #allocation0 [shape = 'u32[]', space=smem, size = 0x4, offset = 0x4, fixed_abs, tag = 'smem constant byte address 0x4 - core index']
  #allocation1 [shape = 'u32[144,128]{1,0:T(1,128)}', space=vmem, size = 0x12000, scoped, tag = 'internal scratch']
  #allocation2 [shape = 'f32[128,128]{1,0:T(8,128)}', space=vmem, size = 0x10000, scoped, tag = 'scratch operand']
  %s0 = inlined_call_operand.hbm [shape: f32[64,128], index: 0, kind: input, shape index: {}]
  %s1 = inlined_call_operand.hbm [shape: f32[1,1], index: 1, kind: output, shape index: {}]
  %s2 = sld [smem:[#allocation0]]
  $region26: #{tpu_custom_call.1} parent=0
    _
  %s4 = ssub.s32 1, %s2
  %s5 = scalar_select 0, %s4, %s2
  $region1: #{tpu_custom_call.1} parent=0
    #allocation3 [shape = 'u8[32768]{0}', space=vmem, size = 0x8000, scoped, tag = 'input window, operand 0, single buffered']
    #allocation4 [shape = 's32[1]{0}', space=sflag, size = 0x4, scoped, tag = 'scoped memory for tpu_custom_call.1']
    #allocation5 [shape = 's32[1]{0}', space=sflag, size = 0x4, scoped, tag = 'scoped memory for tpu_custom_call.1']
    #allocation6 [shape = 'u8[512]{0}', space=smem, size = 0x200, scoped, tag = 'output window, operand 0, single buffered']
    %6 = vsyncpa [#allocation4], 0
    %7 = vsyncpa [#allocation5], 0
    // Predicated region
    $region2: #{tpu_custom_call.1} parent=1 // pred_check
      _
    $region3: #{tpu_custom_call.1} parent=1 // pred_check_branch
      %9 = sbr.rel (0) target = $region5
    $region4: #{tpu_custom_call.1} parent=1 // pred_region
      %s11 = ssub.s32 1024, 1024
      %12 = vsyncadd [#allocation4], %s11
      %s13 = sshll.u32 [#allocation3], 4
      %s14 = int_to_ptr.vmem [resolvable:$true] %s13
      %19 = dma.hbm_to_vmem [thread:$0]  %s0, 1024, %s14, [#allocation4], 128, 128, 8
    $region5: #{tpu_custom_call.1} parent=1 // pred_fallthru
      _
    // Predicated region
    $region6: #{tpu_custom_call.1} parent=1 // pred_check
      _
    $region7: #{tpu_custom_call.1} parent=1 // pred_check_branch
      %21 = sbr.rel (0) target = $region9
    $region8: #{tpu_custom_call.1} parent=1 // pred_region
      %22 = dma.done [#allocation4], 1024
    $region9: #{tpu_custom_call.1} parent=1 // pred_fallthru
      _
    %p23 = scmp.eq.s32.totalorder 0, 0
    // Predicated region
    $region10: #{tpu_custom_call.1} parent=1 // pred_check
      %p24 = pneg %p23
    $region11: #{tpu_custom_call.1} parent=1 // pred_check_branch
      %26 = sbr.rel (%p24) target = $region13
    $region12: #{tpu_custom_call.1} parent=1 // pred_region
      %27 = vst [vmem:[#allocation2] sm:$0xff] 0.0
      %28 = vst [vmem:[#allocation2 + $0x8] sm:$0xff] 0.0
      %29 = vst [vmem:[#allocation2 + $0x10] sm:$0xff] 0.0
      %30 = vst [vmem:[#allocation2 + $0x18] sm:$0xff] 0.0
      %31 = vst [vmem:[#allocation2 + $0x20] sm:$0xff] 0.0
      %32 = vst [vmem:[#allocation2 + $0x28] sm:$0xff] 0.0
      %33 = vst [vmem:[#allocation2 + $0x30] sm:$0xff] 0.0
      %34 = vst [vmem:[#allocation2 + $0x38] sm:$0xff] 0.0
      %35 = vst [vmem:[#allocation2 + $0x40] sm:$0xff] 0.0
      %36 = vst [vmem:[#allocation2 + $0x48] sm:$0xff] 0.0
      %37 = vst [vmem:[#allocation2 + $0x50] sm:$0xff] 0.0
      %38 = vst [vmem:[#allocation2 + $0x58] sm:$0xff] 0.0
      %39 = vst [vmem:[#allocation2 + $0x60] sm:$0xff] 0.0
      %40 = vst [vmem:[#allocation2 + $0x68] sm:$0xff] 0.0
      %41 = vst [vmem:[#allocation2 + $0x70] sm:$0xff] 0.0
      %42 = vst [vmem:[#allocation2 + $0x78] sm:$0xff] 0.0
    $region13: #{tpu_custom_call.1} parent=1 // pred_fallthru
      _
    %v43 = vld [vmem:[#allocation3] sm:$0xff]
    %v44 = vld [vmem:[#allocation3 + $0x8] sm:$0xff]
    %v45 = vld [vmem:[#allocation3 + $0x10] sm:$0xff]
    %v46 = vld [vmem:[#allocation3 + $0x18] sm:$0xff]
    %v47 = vld [vmem:[#allocation3 + $0x20] sm:$0xff]
    %v48 = vld [vmem:[#allocation3 + $0x28] sm:$0xff]
    %v49 = vld [vmem:[#allocation3 + $0x30] sm:$0xff]
    %v50 = vld [vmem:[#allocation3 + $0x38] sm:$0xff]
    %v51 = vld [vmem:[#allocation2] sm:$0xff]
    %v52 = vld [vmem:[#allocation2 + $0x8] sm:$0xff]
    %v53 = vld [vmem:[#allocation2 + $0x10] sm:$0xff]
    %v54 = vld [vmem:[#allocation2 + $0x18] sm:$0xff]
    %v55 = vld [vmem:[#allocation2 + $0x20] sm:$0xff]
    %v56 = vld [vmem:[#allocation2 + $0x28] sm:$0xff]
    %v57 = vld [vmem:[#allocation2 + $0x30] sm:$0xff]
    %v58 = vld [vmem:[#allocation2 + $0x38] sm:$0xff]
    %v59 = vld [vmem:[#allocation2 + $0x40] sm:$0xff]
    %v60 = vld [vmem:[#allocation2 + $0x48] sm:$0xff]
    %v61 = vld [vmem:[#allocation2 + $0x50] sm:$0xff]
    %v62 = vld [vmem:[#allocation2 + $0x58] sm:$0xff]
    %v63 = vld [vmem:[#allocation2 + $0x60] sm:$0xff]
    %v64 = vld [vmem:[#allocation2 + $0x68] sm:$0xff]
    %v65 = vld [vmem:[#allocation2 + $0x70] sm:$0xff]
    %v66 = vld [vmem:[#allocation2 + $0x78] sm:$0xff]
    %67 = vxpose.xlu0.b32.start [1/16] %v43, 128
    %68 = vxpose.xlu0.b32.cont [2/16] %v44, 128
    %69 = vxpose.xlu0.b32.cont [3/16] %v45, 128
    %70 = vxpose.xlu0.b32.cont [4/16] %v46, 128
    %71 = vxpose.xlu0.b32.cont [5/16] %v47, 128
    %72 = vxpose.xlu0.b32.cont [6/16] %v48, 128
    %73 = vxpose.xlu0.b32.cont [7/16] %v49, 128
    %74 = vxpose.xlu0.b32.cont [8/16] %v50, 128
    %75 = vxpose.xlu0.b32.cont [9/16] 0.0, 128
    %76 = vxpose.xlu0.b32.cont [10/16] 0.0, 128
    %77 = vxpose.xlu0.b32.cont [11/16] 0.0, 128
    %78 = vxpose.xlu0.b32.cont [12/16] 0.0, 128
    %79 = vxpose.xlu0.b32.cont [13/16] 0.0, 128
    %80 = vxpose.xlu0.b32.cont [14/16] 0.0, 128
    %81 = vxpose.xlu0.b32.cont [15/16] 0.0, 128
    %82 = vxpose.xlu0.b32.end [16/16] 0.0, 128
    %v83 = vpop.trf.xlu0
    %v84 = vpop.trf.xlu0
    %v85 = vpop.trf.xlu0
    %v86 = vpop.trf.xlu0
    %v87 = vpop.trf.xlu0
    %v88 = vpop.trf.xlu0
    %v89 = vpop.trf.xlu0
    %v90 = vpop.trf.xlu0
    %v91 = vpop.trf.xlu0
    %v92 = vpop.trf.xlu0
    %v93 = vpop.trf.xlu0
    %v94 = vpop.trf.xlu0
    %v95 = vpop.trf.xlu0
    %v96 = vpop.trf.xlu0
    %v97 = vpop.trf.xlu0
    %v98 = vpop.trf.xlu0
    %vm99 = vcmask 523264
    %v101 = vsel %vm99, %v83, 0
    %v104 = vsel %vm99, %v84, 0
    %v107 = vsel %vm99, %v85, 0
    %v110 = vsel %vm99, %v86, 0
    %v113 = vsel %vm99, %v87, 0
    %v116 = vsel %vm99, %v88, 0
    %v119 = vsel %vm99, %v89, 0
    %v122 = vsel %vm99, %v90, 0
    %v125 = vsel %vm99, %v91, 0
    %v128 = vsel %vm99, %v92, 0
    %v131 = vsel %vm99, %v93, 0
    %v134 = vsel %vm99, %v94, 0
    %v137 = vsel %vm99, %v95, 0
    %v140 = vsel %vm99, %v96, 0
    %v143 = vsel %vm99, %v97, 0
    %v146 = vsel %vm99, %v98, 0
    %148 = vmatprep.subr.mxu0 0.0
    %149 = vmatpush1.msra.mxu0 %v43
    %150 = vmatprep.subr.mxu0 0.0
    %151 = vmatpush1.msra.mxu0 %v44
    %152 = vmatprep.subr.mxu0 0.0
    %153 = vmatpush1.msra.mxu0 %v45
    %154 = vmatprep.subr.mxu0 0.0
    %155 = vmatpush1.msra.mxu0 %v46
    %156 = vmatprep.subr.mxu0 0.0
    %157 = vmatpush1.msra.mxu0 %v47
    %158 = vmatprep.subr.mxu0 0.0
    %159 = vmatpush1.msra.mxu0 %v48
    %160 = vmatprep.subr.mxu0 0.0
    %161 = vmatpush1.msra.mxu0 %v49
    %162 = vmatprep.subr.mxu0 0.0
    %163 = vmatpush1.msra.mxu0 %v50
    %164 = vmatprep.subr.mxu0 0.0
    %165 = vmatpush1.msra.mxu0 0.0
    %166 = vmatprep.subr.mxu0 0.0
    %167 = vmatpush1.msra.mxu0 0.0
    %168 = vmatprep.subr.mxu0 0.0
    %169 = vmatpush1.msra.mxu0 0.0
    %170 = vmatprep.subr.mxu0 0.0
    %171 = vmatpush1.msra.mxu0 0.0
    %172 = vmatprep.subr.mxu0 0.0
    %173 = vmatpush1.msra.mxu0 0.0
    %174 = vmatprep.subr.mxu0 0.0
    %175 = vmatpush1.msra.mxu0 0.0
    %176 = vmatprep.subr.mxu0 0.0
    %177 = vmatpush1.msra.mxu0 0.0
    %178 = vmatprep.subr.mxu0 0.0
    %179 = vmatpush1.msra.mxu0 0.0
    %180 = vmatprep.subr.mxu0 0.0
    %181 = vmatpush1.msra.mxu0 0.0
    %182 = vmatprep.subr.mxu0 0.0
    %183 = vmatpush1.msra.mxu0 0.0
    %184 = vmatprep.subr.mxu0 0.0
    %185 = vmatpush1.msra.mxu0 0.0
    %186 = vmatprep.subr.mxu0 0.0
    %187 = vmatpush1.msra.mxu0 0.0
    %188 = vmatprep.subr.mxu0 0.0
    %189 = vmatpush1.msra.mxu0 0.0
    %190 = vmatprep.subr.mxu0 0.0
    %191 = vmatpush1.msra.mxu0 0.0
    %192 = vmatprep.subr.mxu0 0.0
    %193 = vmatpush1.msra.mxu0 0.0
    %194 = vmatprep.subr.mxu0 0.0
    %195 = vmatpush1.msra.mxu0 0.0
    %196 = vmatprep.subr.mxu0 0.0
    %197 = vmatpush1.msra.mxu0 0.0
    %198 = vmatprep.subr.mxu0 0.0
    %199 = vmatpush1.msra.mxu0 0.0
    %200 = vmatprep.subr.mxu0 0.0
    %201 = vmatpush1.msra.mxu0 0.0
    %202 = vmatprep.subr.mxu0 0.0
    %203 = vmatpush1.msra.mxu0 0.0
    %204 = vmatprep.subr.mxu0 0.0
    %205 = vmatpush1.msra.mxu0 0.0
    %206 = vmatprep.subr.mxu0 0.0
    %207 = vmatpush1.msra.mxu0 0.0
    %208 = vmatprep.subr.mxu0 0.0
    %209 = vmatpush1.msra.mxu0 0.0
    %210 = vmatprep.subr.mxu0 0.0
    %211 = vmatpush1.msra.mxu0 0.0
    %212 = vmatprep.mubr.f32.mxu0 0.0
    %213 = vmatmul.mubr.f32.gmra.mrb[0].mxu0 %v101
    %v214 = vpop.f32.mrb[0].mxu0
    %v215 = vadd.f32 0.0, %v214
    %v216 = vpop.f32.mrb[0].mxu0
    %217 = vmatprep.mubr.f32.mxu0 0.0
    %218 = vmatmul.mubr.f32.gmra.mrb[0].mxu0 %v104
    %v219 = vpop.f32.mrb[0].mxu0
    %v220 = vadd.f32 0.0, %v219
    %v221 = vpop.f32.mrb[0].mxu0
    %222 = vmatprep.mubr.f32.mxu0 0.0
    %223 = vmatmul.mubr.f32.gmra.mrb[0].mxu0 %v107
    %v224 = vpop.f32.mrb[0].mxu0
    %v225 = vadd.f32 0.0, %v224
    %v226 = vpop.f32.mrb[0].mxu0
    %227 = vmatprep.mubr.f32.mxu0 0.0
    %228 = vmatmul.mubr.f32.gmra.mrb[0].mxu0 %v110
    %v229 = vpop.f32.mrb[0].mxu0
    %v230 = vadd.f32 0.0, %v229
    %v231 = vpop.f32.mrb[0].mxu0
    %232 = vmatprep.mubr.f32.mxu0 0.0
    %233 = vmatmul.mubr.f32.gmra.mrb[0].mxu0 %v113
    %v234 = vpop.f32.mrb[0].mxu0
    %v235 = vadd.f32 0.0, %v234
    %v236 = vpop.f32.mrb[0].mxu0
    %237 = vmatprep.mubr.f32.mxu0 0.0
    %238 = vmatmul.mubr.f32.gmra.mrb[0].mxu0 %v116
    %v239 = vpop.f32.mrb[0].mxu0
    %v240 = vadd.f32 0.0, %v239
    %v241 = vpop.f32.mrb[0].mxu0
    %242 = vmatprep.mubr.f32.mxu0 0.0
    %243 = vmatmul.mubr.f32.gmra.mrb[0].mxu0 %v119
    %v244 = vpop.f32.mrb[0].mxu0
    %v245 = vadd.f32 0.0, %v244
    %v246 = vpop.f32.mrb[0].mxu0
    %247 = vmatprep.mubr.f32.mxu0 0.0
    %248 = vmatmul.mubr.f32.gmra.mrb[0].mxu0 %v122
    %v249 = vpop.f32.mrb[0].mxu0
    %v250 = vadd.f32 0.0, %v249
    %v251 = vpop.f32.mrb[0].mxu0
    %252 = vmatprep.mubr.f32.mxu0 0.0
    %253 = vmatmul.mubr.f32.gmra.mrb[0].mxu0 %v125
    %v254 = vpop.f32.mrb[0].mxu0
    %v255 = vadd.f32 0.0, %v254
    %v256 = vpop.f32.mrb[0].mxu0
    %257 = vmatprep.mubr.f32.mxu0 0.0
    %258 = vmatmul.mubr.f32.gmra.mrb[0].mxu0 %v128
    %v259 = vpop.f32.mrb[0].mxu0
    %v260 = vadd.f32 0.0, %v259
    %v261 = vpop.f32.mrb[0].mxu0
    %262 = vmatprep.mubr.f32.mxu0 0.0
    %263 = vmatmul.mubr.f32.gmra.mrb[0].mxu0 %v131
    %v264 = vpop.f32.mrb[0].mxu0
    %v265 = vadd.f32 0.0, %v264
    %v266 = vpop.f32.mrb[0].mxu0
    %267 = vmatprep.mubr.f32.mxu0 0.0
    %268 = vmatmul.mubr.f32.gmra.mrb[0].mxu0 %v134
    %v269 = vpop.f32.mrb[0].mxu0
    %v270 = vadd.f32 0.0, %v269
    %v271 = vpop.f32.mrb[0].mxu0
    %272 = vmatprep.mubr.f32.mxu0 0.0
    %273 = vmatmul.mubr.f32.gmra.mrb[0].mxu0 %v137
    %v274 = vpop.f32.mrb[0].mxu0
    %v275 = vadd.f32 0.0, %v274
    %v276 = vpop.f32.mrb[0].mxu0
    %277 = vmatprep.mubr.f32.mxu0 0.0
    %278 = vmatmul.mubr.f32.gmra.mrb[0].mxu0 %v140
    %v279 = vpop.f32.mrb[0].mxu0
    %v280 = vadd.f32 0.0, %v279
    %v281 = vpop.f32.mrb[0].mxu0
    %282 = vmatprep.mubr.f32.mxu0 0.0
    %283 = vmatmul.mubr.f32.gmra.mrb[0].mxu0 %v143
    %v284 = vpop.f32.mrb[0].mxu0
    %v285 = vadd.f32 0.0, %v284
    %v286 = vpop.f32.mrb[0].mxu0
    %287 = vmatprep.mubr.f32.mxu0 0.0
    %288 = vmatmul.mubr.f32.gmra.mrb[0].mxu0 %v146
    %v289 = vpop.f32.mrb[0].mxu0
    %v290 = vadd.f32 0.0, %v289
    %v291 = vpop.f32.mrb[0].mxu0
    %292 = vdwg.mxu0
    %v293 = vadd.f32 %v51, %v215
    %v294 = vadd.f32 %v52, %v220
    %v295 = vadd.f32 %v53, %v225
    %v296 = vadd.f32 %v54, %v230
    %v297 = vadd.f32 %v55, %v235
    %v298 = vadd.f32 %v56, %v240
    %v299 = vadd.f32 %v57, %v245
    %v300 = vadd.f32 %v58, %v250
    %v301 = vadd.f32 %v59, %v255
    %v302 = vadd.f32 %v60, %v260
    %v303 = vadd.f32 %v61, %v265
    %v304 = vadd.f32 %v62, %v270
    %v305 = vadd.f32 %v63, %v275
    %v306 = vadd.f32 %v64, %v280
    %v307 = vadd.f32 %v65, %v285
    %v308 = vadd.f32 %v66, %v290
    %309 = vst [vmem:[#allocation2] sm:$0xff] %v293
    %310 = vst [vmem:[#allocation2 + $0x8] sm:$0xff] %v294
    %311 = vst [vmem:[#allocation2 + $0x10] sm:$0xff] %v295
    %312 = vst [vmem:[#allocation2 + $0x18] sm:$0xff] %v296
    %313 = vst [vmem:[#allocation2 + $0x20] sm:$0xff] %v297
    %314 = vst [vmem:[#allocation2 + $0x28] sm:$0xff] %v298
    %315 = vst [vmem:[#allocation2 + $0x30] sm:$0xff] %v299
    %316 = vst [vmem:[#allocation2 + $0x38] sm:$0xff] %v300
    %317 = vst [vmem:[#allocation2 + $0x40] sm:$0xff] %v301
    %318 = vst [vmem:[#allocation2 + $0x48] sm:$0xff] %v302
    %319 = vst [vmem:[#allocation2 + $0x50] sm:$0xff] %v303
    %320 = vst [vmem:[#allocation2 + $0x58] sm:$0xff] %v304
    %321 = vst [vmem:[#allocation2 + $0x60] sm:$0xff] %v305
    %322 = vst [vmem:[#allocation2 + $0x68] sm:$0xff] %v306
    %323 = vst [vmem:[#allocation2 + $0x70] sm:$0xff] %v307
    %324 = vst [vmem:[#allocation2 + $0x78] sm:$0xff] %v308
    // Predicated region
    $region14: #{tpu_custom_call.1} parent=1 // pred_check
      %p325 = pneg %p23
    $region15: #{tpu_custom_call.1} parent=1 // pred_check_branch
      %327 = sbr.rel (%p325) target = $region17
    $region16: #{tpu_custom_call.1} parent=1 // pred_region
      %v328 = vlaneseq
      %v329 = vand.u32 %v328, 127
      %vm330 = vcmp.ge.s32.totalorder %v329, 0
      %vm331 = vcmp.lt.s32.totalorder %v329, 16
      %vm332 = vmand %vm330, %vm331
      %vm333 = vmxor %vm332, 1
      %v334 = vld [vmem:[#allocation2] sm:$0xff]
      %v335 = vld [vmem:[#allocation2 + $0x8] sm:$0xff]
      %v336 = vsel %vm333, 1, 0
      %vm337 = vcmp.eq.s32.totalorder %v336, 1
      %v338 = vsel %vm337, %v334, 0.0
      %v339 = vsel %vm337, %v335, 0.0
      %v340 = vmul.f32 %v338, %v338
      %v341 = vmul.f32 %v339, %v339
      %v342 = vadd.f32 %v340, %v341
      %v343 = vrot.slane %v342, 4
      %v344 = vadd.f32 %v342, %v343
      %v345 = vrot.slane %v344, 2
      %v346 = vadd.f32 %v344, %v345
      %v347 = vrot.slane %v346, 1
      %v348 = vadd.f32 %v346, %v347
      %v349 = vadd.f32 %v348, 0.0
      %vm350 = vcmp.ge.s32.totalorder %v329, 16
      %vm351 = vcmp.lt.s32.totalorder %v329, 32
      %vm352 = vmand %vm350, %vm351
      %vm353 = vmxor %vm352, 1
      %v354 = vld [vmem:[#allocation2 + $0x10] sm:$0xff]
      %v355 = vld [vmem:[#allocation2 + $0x18] sm:$0xff]
      %v356 = vsel %vm353, 1, 0
      %vm357 = vcmp.eq.s32.totalorder %v356, 1
      %v358 = vsel %vm357, %v354, 0.0
      %v359 = vsel %vm357, %v355, 0.0
      %v360 = vmul.f32 %v358, %v358
      %v361 = vmul.f32 %v359, %v359
      %v362 = vadd.f32 %v360, %v361
      %v363 = vrot.slane %v362, 4
      %v364 = vadd.f32 %v362, %v363
      %v365 = vrot.slane %v364, 2
      %v366 = vadd.f32 %v364, %v365
      %v367 = vrot.slane %v366, 1
      %v368 = vadd.f32 %v366, %v367
      %v369 = vadd.f32 %v349, %v368
      %vm370 = vcmp.ge.s32.totalorder %v329, 32
      %vm371 = vcmp.lt.s32.totalorder %v329, 48
      %vm372 = vmand %vm370, %vm371
      %vm373 = vmxor %vm372, 1
      %v374 = vld [vmem:[#allocation2 + $0x20] sm:$0xff]
      %v375 = vld [vmem:[#allocation2 + $0x28] sm:$0xff]
      %v376 = vsel %vm373, 1, 0
      %vm377 = vcmp.eq.s32.totalorder %v376, 1
      %v378 = vsel %vm377, %v374, 0.0
      %v379 = vsel %vm377, %v375, 0.0
      %v380 = vmul.f32 %v378, %v378
      %v381 = vmul.f32 %v379, %v379
      %v382 = vadd.f32 %v380, %v381
      %v383 = vrot.slane %v382, 4
      %v384 = vadd.f32 %v382, %v383
      %v385 = vrot.slane %v384, 2
      %v386 = vadd.f32 %v384, %v385
      %v387 = vrot.slane %v386, 1
      %v388 = vadd.f32 %v386, %v387
      %v389 = vadd.f32 %v369, %v388
      %vm390 = vcmp.ge.s32.totalorder %v329, 48
      %vm391 = vcmp.lt.s32.totalorder %v329, 64
      %vm392 = vmand %vm390, %vm391
      %vm393 = vmxor %vm392, 1
      %v394 = vld [vmem:[#allocation2 + $0x30] sm:$0xff]
      %v395 = vld [vmem:[#allocation2 + $0x38] sm:$0xff]
      %v396 = vsel %vm393, 1, 0
      %vm397 = vcmp.eq.s32.totalorder %v396, 1
      %v398 = vsel %vm397, %v394, 0.0
      %v399 = vsel %vm397, %v395, 0.0
      %v400 = vmul.f32 %v398, %v398
      %v401 = vmul.f32 %v399, %v399
      %v402 = vadd.f32 %v400, %v401
      %v403 = vrot.slane %v402, 4
      %v404 = vadd.f32 %v402, %v403
      %v405 = vrot.slane %v404, 2
      %v406 = vadd.f32 %v404, %v405
      %v407 = vrot.slane %v406, 1
      %v408 = vadd.f32 %v406, %v407
      %v409 = vadd.f32 %v389, %v408
      %v410 = vld [vmem:[#allocation2 + $0x40] sm:$0xff]
      %v411 = vld [vmem:[#allocation2 + $0x48] sm:$0xff]
      %v412 = vld [vmem:[#allocation2 + $0x50] sm:$0xff]
      %v413 = vld [vmem:[#allocation2 + $0x58] sm:$0xff]
      %v414 = vld [vmem:[#allocation2 + $0x60] sm:$0xff]
      %v415 = vld [vmem:[#allocation2 + $0x68] sm:$0xff]
      %v416 = vld [vmem:[#allocation2 + $0x70] sm:$0xff]
      %v417 = vld [vmem:[#allocation2 + $0x78] sm:$0xff]
      %v418 = vmul.f32 %v410, %v410
      %v419 = vmul.f32 %v411, %v411
      %v420 = vmul.f32 %v412, %v412
      %v421 = vmul.f32 %v413, %v413
      %v422 = vmul.f32 %v414, %v414
      %v423 = vmul.f32 %v415, %v415
      %v424 = vmul.f32 %v416, %v416
      %v425 = vmul.f32 %v417, %v417
      %v426 = vadd.f32 %v418, %v419
      %v427 = vadd.f32 %v426, %v420
      %v428 = vadd.f32 %v427, %v421
      %v429 = vadd.f32 %v428, %v422
      %v430 = vadd.f32 %v429, %v423
      %v431 = vadd.f32 %v430, %v424
      %v432 = vadd.f32 %v431, %v425
      %v433 = vrot.slane %v432, 4
      %v434 = vadd.f32 %v432, %v433
      %v435 = vrot.slane %v434, 2
      %v436 = vadd.f32 %v434, %v435
      %v437 = vrot.slane %v436, 1
      %v438 = vadd.f32 %v436, %v437
      %v439 = vadd.f32 %v409, %v438
      %vm440 = vcmask 1040384
      %v441 = vsel %vm440, %v439, 0.0
      %442 = vadd.xlane.f32.xlu0 %v441
      %v443 = vpop.xlane.xlu0 %442
      %v444 = vrot.slane %v443, 4
      %v445 = vadd.f32 %v443, %v444
      %v446 = vrot.slane %v445, 2
      %v447 = vadd.f32 %v445, %v446
      %v448 = vrot.slane %v447, 1
      %v449 = vadd.f32 %v447, %v448
      %s450 = vtos %v449
      %v451 = vstv %s450
      %v452 = vrsqrt.pop %v451
      %v453 = vmul.f32 %v451, %v452
      %vm454 = vcmp.eq.f32.partialorder %v451, inf
      %v455 = vsel %vm454, %v451, %v453
      %vm456 = vcmp.eq.f32.partialorder %v451, 0.0
      %v457 = vand.u32 %v451, 2147483648
      %v458 = vsel %vm456, %v457, %v455
      %s459 = vtos %v458
      %s460 = scalar_lea.smem [#allocation6], 0
      %461 = sst [smem:[%s460]] %s459
    $region17: #{tpu_custom_call.1} parent=1 // pred_fallthru
      _
    // Predicated region
    $region18: #{tpu_custom_call.1} parent=1 // pred_check
      _
    $region19: #{tpu_custom_call.1} parent=1 // pred_check_branch
      %463 = sbr.rel (0) target = $region21
    $region20: #{tpu_custom_call.1} parent=1 // pred_region
      %s465 = ssub.s32 16, 16
      %466 = vsyncadd [#allocation5], %s465
      %469 = dma.smem_to_hbm [#allocation6], 16, %s1, [#allocation5]
    $region21: #{tpu_custom_call.1} parent=1 // pred_fallthru
      _
    // Predicated region
    $region22: #{tpu_custom_call.1} parent=1 // pred_check
      _
    $region23: #{tpu_custom_call.1} parent=1 // pred_check_branch
      %471 = sbr.rel (0) target = $region25
    $region24: #{tpu_custom_call.1} parent=1 // pred_region
      %472 = dma.done [#allocation5], 16
    $region25: #{tpu_custom_call.1} parent=1 // pred_fallthru
      _
    %473 = sfence
    %474 = vsyncpa [#allocation4], 1
    %475 = vsyncpa [#allocation5], 1

</llo_original>
